<compile_context>
chip_gen: v6e
topology: v6e:2x2x1
jax: 0.10.0
libtpu: 0.0.40
codegen_flags: <defaults>
</compile_context>

<pallas_src>
import math
import functools

import jax
import jax.numpy as jnp
from jax.experimental import pallas as pl
from jax.experimental.pallas import tpu as pltpu


# ----------------------------------------------------------------------------
# Parameter / buffer construction (deterministic, mirrors __init__)
# ----------------------------------------------------------------------------
def make_positional_encoding_table(max_len, dim_model, dtype=jnp.float32):
    """pe[l, 0::2] = sin(l * div), pe[l, 1::2] = cos(l * div)."""
    position = jnp.arange(max_len, dtype=jnp.float32)[:, None]               # (L, 1)
    div_term = jnp.exp(
        jnp.arange(0, dim_model, 2, dtype=jnp.float32)
        * (-math.log(10000.0) / dim_model)
    )                                                                        # (D/2,)
    angles = position * div_term                                             # (L, D/2)
    pe = jnp.zeros((max_len, dim_model), dtype=jnp.float32)
    pe = pe.at[:, 0::2].set(jnp.sin(angles))
    pe = pe.at[:, 1::2].set(jnp.cos(angles))
    return pe.astype(dtype)


# ----------------------------------------------------------------------------
# Pallas kernels (operate on lane-dense flattened (B, S*D) views)
# ----------------------------------------------------------------------------
def _pe_add_kernel(x_ref, pe_ref, o_ref):
    # eval-mode forward: x + pe  (pe block is (1, TC), broadcast over batch)
    o_ref[...] = x_ref[...] + pe_ref[...]


def _pe_add_dropout_kernel(x_ref, pe_ref, bits_ref, o_ref, *, threshold, scale):
    # training-mode forward: inverted dropout(x + pe).
    # keep iff bits >= threshold, where threshold = round(p * 2**32),
    # so P(keep) = 1 - p.  Scale kept elements by 1/(1-p).
    y = x_ref[...] + pe_ref[...]
    keep = bits_ref[...] >= jnp.uint32(threshold)
    o_ref[...] = jnp.where(keep, y * jnp.array(scale, dtype=y.dtype),
                           jnp.zeros_like(y))


# ----------------------------------------------------------------------------
# Tile selection: biggest lane-dense column tile that divides N and keeps one
# (B, TC) buffer under ~2 MiB (double-buffered x/pe/out stays far below the
# scoped-VMEM default even on v7x).
# ----------------------------------------------------------------------------
def _pick_col_tile(n_cols, n_rows, itemsize, target_bytes=2 * 1024 * 1024):
    if n_cols % 128 != 0:
        # Fall back to the full (always-legal) width; typical only for tiny D.
        return n_cols
    best = 128
    t = 128
    while t <= n_cols:
        if n_cols % t == 0 and n_rows * t * itemsize <= target_bytes:
            best = t
        t += 128
    return best


# ----------------------------------------------------------------------------
# Wrapper
# ----------------------------------------------------------------------------
def positional_encoding_forward(x, pe_table, *, p=0.1, training=False,
                                rng_key=None):
    """x: (B, S, D).  pe_table: (max_len, D) with max_len >= S."""
    B, S, D = x.shape
    N = S * D

    pe_s = pe_table[:S, :].astype(x.dtype)          # glue: slice + dtype match
    xf = x.reshape(B, N)                            # lane-dense flattened view
    pef = pe_s.reshape(1, N)

    tc = _pick_col_tile(N, B, jnp.dtype(x.dtype).itemsize)
    grid = (N // tc,)

    x_spec = pl.BlockSpec((B, tc), lambda j: (0, j))
    pe_spec = pl.BlockSpec((1, tc), lambda j: (0, j))
    out_spec = pl.BlockSpec((B, tc), lambda j: (0, j))
    cparams = pltpu.CompilerParams(dimension_semantics=("parallel",))

    if (not training) or p == 0.0:
        out = pl.pallas_call(
            _pe_add_kernel,
            out_shape=jax.ShapeDtypeStruct((B, N), x.dtype),
            grid=grid,
            in_specs=[x_spec, pe_spec],
            out_specs=out_spec,
            compiler_params=cparams,
        )(xf, pef)
        return out.reshape(B, S, D)

    if rng_key is None:
        rng_key = jax.random.PRNGKey(0)
    bits = jax.random.bits(rng_key, (B, N), dtype=jnp.uint32)
    threshold = min(int(round(float(p) * 2.0 ** 32)), 2 ** 32 - 1)
    scale = 1.0 / (1.0 - float(p))

    kernel = functools.partial(
        _pe_add_dropout_kernel, threshold=threshold, scale=scale
    )
    out = pl.pallas_call(
        kernel,
        out_shape=jax.ShapeDtypeStruct((B, N), x.dtype),
        grid=grid,
        in_specs=[x_spec, pe_spec, pl.BlockSpec((B, tc), lambda j: (0, j))],
        out_specs=out_spec,
        compiler_params=cparams,
    )(xf, pef, bits)
    return out.reshape(B, S, D)


# ----------------------------------------------------------------------------
# Main
# ----------------------------------------------------------------------------
if __name__ == "__main__":
    B, S, D = 2, 8, 32
    MAX_LEN = 64
    DROPOUT_P = 0.1

    root = jax.random.PRNGKey(0)
    x_key, drop_key = jax.random.split(root)
    x = jax.random.normal(x_key, (B, S, D), dtype=jnp.float32)
    pe_table = make_positional_encoding_table(MAX_LEN, D)

    # --- Eval-mode forward (dropout == identity): check vs pure-JAX reference.
    out_eval = positional_encoding_forward(x, pe_table, p=DROPOUT_P,
                                           training=False)
    out_eval = jax.block_until_ready(out_eval)
    ref_eval = x + pe_table[None, :S, :]
    assert out_eval.shape == (B, S, D)
    assert jnp.allclose(out_eval, ref_eval, atol=1e-6, rtol=1e-6), \
        "eval mismatch vs reference"

    # --- Training-mode forward: exact check vs a JAX reference that uses the
    #     same uint32 bits / threshold / scale.
    out_train = positional_encoding_forward(
        x, pe_table, p=DROPOUT_P, training=True, rng_key=drop_key
    )
    out_train = jax.block_until_ready(out_train)
    assert out_train.shape == (B, S, D)

    threshold = min(int(round(DROPOUT_P * 2.0 ** 32)), 2 ** 32 - 1)
    scale = 1.0 / (1.0 - DROPOUT_P)
    ref_bits = jax.random.bits(drop_key, (B, S * D),
                               dtype=jnp.uint32).reshape(B, S, D)
    keep = ref_bits >= jnp.uint32(threshold)
    ref_train = jnp.where(keep, (x + pe_table[None, :S, :]) * scale, 0.0)
    assert jnp.allclose(out_train, ref_train, atol=1e-6, rtol=1e-6), \
        "train mismatch vs reference"
    assert bool(jnp.all(jnp.isfinite(out_train)))

    print("KERNEL_OK")
</pallas_src>

<mosaic_0001>
module attributes {stable_mosaic.version = 11 : i64} {
  func.func @_pe_add_kernel(%arg0: i32, %arg1: memref<2x256xf32, #tpu.memory_space<vmem>>, %arg2: memref<1x256xf32, #tpu.memory_space<vmem>>, %arg3: memref<2x256xf32, #tpu.memory_space<vmem>>) attributes {dimension_semantics = [#tpu.dimension_semantics<parallel>], iteration_bounds = array<i64: 1>, scalar_prefetch = 0 : i64, scratch_operands = 0 : i64, tpu.core_type = #tpu.core_type<tc>, window_params = [{transform_indices = @transform_0, window_bounds = array<i64: 2, 256>}, {transform_indices = @transform_1, window_bounds = array<i64: 1, 256>}, {transform_indices = @transform_2, window_bounds = array<i64: 2, 256>}]} {
    %c0 = arith.constant 0 : index
    %c0_0 = arith.constant 0 : index
    %0 = vector.load %arg1[%c0, %c0_0] : memref<2x256xf32, #tpu.memory_space<vmem>>, vector<2x256xf32>
    %c0_1 = arith.constant 0 : index
    %c0_2 = arith.constant 0 : index
    %1 = vector.load %arg2[%c0_1, %c0_2] : memref<1x256xf32, #tpu.memory_space<vmem>>, vector<1x256xf32>
    %2 = vector.broadcast %1 : vector<1x256xf32> to vector<2x256xf32>
    %3 = arith.addf %0, %2 : vector<2x256xf32>
    %c0_3 = arith.constant 0 : index
    %c0_4 = arith.constant 0 : index
    %4 = vector.load %arg3[%c0_3, %c0_4] : memref<2x256xf32, #tpu.memory_space<vmem>>, vector<2x256xf32>
    tpu.vector_store %arg3[%c0_3, %c0_4], %3 {strides = array<i32>} : memref<2x256xf32, #tpu.memory_space<vmem>>, vector<2x256xf32>,
    return
  }
  func.func @transform_0(%arg0: i32) -> (i32, i32) {
    %c0_i32 = arith.constant 0 : i32
    %c0_i32_0 = arith.constant 0 : i32
    return %c0_i32, %arg0 : i32, i32
  }
  func.func @transform_1(%arg0: i32) -> (i32, i32) {
    %c0_i32 = arith.constant 0 : i32
    %c0_i32_0 = arith.constant 0 : i32
    return %c0_i32, %arg0 : i32, i32
  }
  func.func @transform_2(%arg0: i32) -> (i32, i32) {
    %c0_i32 = arith.constant 0 : i32
    %c0_i32_0 = arith.constant 0 : i32
    return %c0_i32, %arg0 : i32, i32
  }
}

</mosaic_0001>

<llo_original>
// kernel: tpu_custom_call.1
$region0: #{tpu_custom_call.1}
  #allocation0 [shape = 'u32[]', space=smem, size = 0x4, offset = 0x4, fixed_abs, tag = 'smem constant byte address 0x4 - core index']
  #allocation1 [shape = 'u32[144,128]{1,0:T(1,128)}', space=vmem, size = 0x12000, scoped, tag = 'internal scratch']
  %s0 = inlined_call_operand.hbm [shape: f32[2,256], index: 0, kind: input, shape index: {}]
  %s1 = inlined_call_operand.hbm [shape: f32[1,256], index: 1, kind: input, shape index: {}]
  %s2 = inlined_call_operand.hbm [shape: f32[2,256], index: 2, kind: output, shape index: {}]
  %s3 = sld [smem:[#allocation0]]
  $region26: #{tpu_custom_call.1} parent=0
    _
  %s5 = ssub.s32 1, %s3
  %s6 = scalar_select 0, %s5, %s3
  $region1: #{tpu_custom_call.1} parent=0
    #allocation2 [shape = 'u8[2048]{0}', space=vmem, size = 0x800, scoped, tag = 'input window, operand 0, single buffered']
    #allocation3 [shape = 's32[1]{0}', space=sflag, size = 0x4, scoped, tag = 'scoped memory for tpu_custom_call.1']
    #allocation4 [shape = 's32[1]{0}', space=sflag, size = 0x4, scoped, tag = 'scoped memory for tpu_custom_call.1']
    #allocation5 [shape = 'u8[1024]{0}', space=vmem, size = 0x400, scoped, tag = 'input window, operand 1, single buffered']
    #allocation6 [shape = 's32[1]{0}', space=sflag, size = 0x4, scoped, tag = 'scoped memory for tpu_custom_call.1']
    #allocation7 [shape = 'u8[2048]{0}', space=vmem, size = 0x800, scoped, tag = 'output window, operand 0, single buffered']
    %7 = vsyncpa [#allocation3], 0
    %8 = vsyncpa [#allocation6], 0
    %9 = vsyncpa [#allocation4], 0
    // Predicated region
    $region2: #{tpu_custom_call.1} parent=1 // pred_check
      _
    $region3: #{tpu_custom_call.1} parent=1 // pred_check_branch
      %11 = sbr.rel (0) target = $region5
    $region4: #{tpu_custom_call.1} parent=1 // pred_region
      %s13 = ssub.s32 64, 64
      %14 = vsyncadd [#allocation3], %s13
      %s16 = sshll.u32 [#allocation2], 4
      %s17 = int_to_ptr.vmem [resolvable:$true] %s16
      %19 = dma.hbm_to_vmem [thread:$0]  %s0, 64, %s17, [#allocation3]
    $region5: #{tpu_custom_call.1} parent=1 // pred_fallthru
      _
    // Predicated region
    $region6: #{tpu_custom_call.1} parent=1 // pred_check
      _
    $region7: #{tpu_custom_call.1} parent=1 // pred_check_branch
      %21 = sbr.rel (0) target = $region9
    $region8: #{tpu_custom_call.1} parent=1 // pred_region
      %s23 = ssub.s32 32, 32
      %24 = vsyncadd [#allocation6], %s23
      %s26 = sshll.u32 [#allocation5], 4
      %s27 = int_to_ptr.vmem [resolvable:$true] %s26
      %29 = dma.hbm_to_vmem [thread:$0]  %s1, 32, %s27, [#allocation6]
    $region9: #{tpu_custom_call.1} parent=1 // pred_fallthru
      _
    // Predicated region
    $region10: #{tpu_custom_call.1} parent=1 // pred_check
      _
    $region11: #{tpu_custom_call.1} parent=1 // pred_check_branch
      %31 = sbr.rel (0) target = $region13
    $region12: #{tpu_custom_call.1} parent=1 // pred_region
      %32 = dma.done [#allocation3], 64
    $region13: #{tpu_custom_call.1} parent=1 // pred_fallthru
      _
    // Predicated region
    $region14: #{tpu_custom_call.1} parent=1 // pred_check
      _
    $region15: #{tpu_custom_call.1} parent=1 // pred_check_branch
      %34 = sbr.rel (0) target = $region17
    $region16: #{tpu_custom_call.1} parent=1 // pred_region
      %35 = dma.done [#allocation6], 32
    $region17: #{tpu_custom_call.1} parent=1 // pred_fallthru
      _
    %v36 = vld [vmem:[#allocation2] sm:$0xf]
    %v37 = vld [vmem:[#allocation5] sm:$0x3]
    %v39 = vlaneseq
    %v40 = vshrl.u32 %v39, 7
    %v41 = vsub.s32 0, %v40
    %v42 = vrot.slane %v37, %v41
    %v43 = vlaneseq
    %v44 = vshrl.u32 %v43, 7
    %v45 = vsub.s32 1, %v44
    %v46 = vrot.slane %v37, %v45
    %v47 = vcombine.low %v42, %v46
    %v49 = vunpack.c.l.s4 1983009808
    %v50 = vunpack.c.0.s8 %v49
    %v51 = vlaneseq
    %v52 = vshrl.u32 %v51, 7
    %v53 = vsub.s32 %v50, %v52
    %v54 = vrot.slane %v47, %v53
    %v56 = vadd.f32 %v36, %v54
    %57 = vst [vmem:[#allocation7] sm:$0xf] %v56
    // Predicated region
    $region18: #{tpu_custom_call.1} parent=1 // pred_check
      _
    $region19: #{tpu_custom_call.1} parent=1 // pred_check_branch
      %59 = sbr.rel (0) target = $region21
    $region20: #{tpu_custom_call.1} parent=1 // pred_region
      %s61 = ssub.s32 64, 64
      %62 = vsyncadd [#allocation4], %s61
      %s64 = sshll.u32 [#allocation7], 4
      %s65 = int_to_ptr.vmem [resolvable:$true] %s64
      %67 = dma.vmem_to_hbm [thread:$0]  %s65, 64, %s2, [#allocation4]
    $region21: #{tpu_custom_call.1} parent=1 // pred_fallthru
      _
    // Predicated region
    $region22: #{tpu_custom_call.1} parent=1 // pred_check
      _
    $region23: #{tpu_custom_call.1} parent=1 // pred_check_branch
      %69 = sbr.rel (0) target = $region25
    $region24: #{tpu_custom_call.1} parent=1 // pred_region
      %70 = dma.done [#allocation4], 64
    $region25: #{tpu_custom_call.1} parent=1 // pred_fallthru
      _
    %71 = vsyncpa [#allocation3], 1
    %72 = vsyncpa [#allocation6], 1
    %73 = vsyncpa [#allocation4], 1

</llo_original>
